<compile_context>
chip_gen: v7x
topology: tpu7x:2x2x1
jax: 0.10.0
libtpu: 0.0.40
codegen_flags: <defaults>
</compile_context>

<pallas_src>
import jax
import jax.numpy as jnp
from jax.experimental import pallas as pl
from jax.experimental.pallas import tpu as pltpu


def _round_up(x, m):
    return ((x + m - 1) // m) * m


def _cdiv(a, b):
    return (a + b - 1) // b


# ---------------------------------------------------------------------------
# Kernels
# ---------------------------------------------------------------------------

def _linear_kernel_direct(x_ref, w_ref, b_ref, o_ref):
    """f32-output path: accumulate straight into the output block.

    The output BlockSpec's index_map ignores the K grid axis, so o_ref stays
    resident in VMEM across all K steps of a given (i, j) tile -> it doubles
    as the f32 accumulator (no tm*tn scratch, no epilogue copy)."""
    k = pl.program_id(2)

    @pl.when(k == 0)
    def _():
        # Initialize with the bias -> no separate bias-add epilogue.
        o_ref[...] = jnp.broadcast_to(b_ref[...], o_ref.shape)

    o_ref[...] += jnp.dot(
        x_ref[...], w_ref[...], preferred_element_type=jnp.float32
    )


def _linear_kernel_acc(x_ref, w_ref, b_ref, o_ref, acc_ref):
    """Non-f32-output path: f32 scratch accumulator, cast on the last K step."""
    k = pl.program_id(2)

    @pl.when(k == 0)
    def _():
        acc_ref[...] = jnp.broadcast_to(b_ref[...], acc_ref.shape)

    acc_ref[...] += jnp.dot(
        x_ref[...], w_ref[...], preferred_element_type=jnp.float32
    )

    @pl.when(k == pl.num_programs(2) - 1)
    def _():
        o_ref[...] = acc_ref[...].astype(o_ref.dtype)


# ---------------------------------------------------------------------------
# Wrapper
# ---------------------------------------------------------------------------

# VMEM working-set budget used to derive tile sizes.  Keeps double-buffered
# tiles + accumulator well under the tightest limits (v7x: 32 MiB scoped /
# 64 MiB physical); the scoped limit itself is raised via vmem_limit_bytes
# (v5e's 16 MiB default would otherwise cap tk).
_VMEM_TILE_BUDGET = 20 * 1024 * 1024


def _vmem_footprint(tm, tk, tn, x_bytes, w_bytes, o_bytes, need_acc):
    fp = (2 * tm * tk * x_bytes      # double-buffered x tile
          + 2 * tk * tn * w_bytes    # double-buffered W tile
          + 2 * 1 * tn * 4           # double-buffered bias tile
          + 2 * tm * tn * o_bytes)   # double-buffered out tile
    if need_acc:
        fp += tm * tn * 4            # f32 accumulator scratch
    return fp


def linear_classifier_forward(x, weight, bias, *, tm=256, tn=512, tk=1024,
                              compute_dtype=None):
    """Pallas implementation of LinearClassifier.forward.

    x:      (B, dim) or (B, C, H, W) -- flattened row-major like x.view(B, -1)
    weight: (num_labels, dim)
    bias:   (num_labels,)
    compute_dtype: optional MXU operand dtype (e.g. jnp.bfloat16 on v6e/v7x);
                   accumulation stays f32, output keeps x's original dtype.
    returns (B, num_labels)
    """
    B = x.shape[0]
    x_flat = x.reshape(B, -1)                      # same as torch x.view(B, -1)
    dim = x_flat.shape[1]
    num_labels, wdim = weight.shape
    assert wdim == dim, (weight.shape, dim)
    assert bias.shape == (num_labels,)

    out_dtype = x_flat.dtype                       # output matches input dtype

    # Operand dtype fed to the MXU.
    if compute_dtype is not None:
        x_flat = x_flat.astype(compute_dtype)
    w_t = weight.T                                 # one-time (dim, num_labels)
    if compute_dtype is not None:
        w_t = w_t.astype(compute_dtype)
    b2 = bias.reshape(1, num_labels).astype(jnp.float32)

    x_bytes = x_flat.dtype.itemsize
    w_bytes = w_t.dtype.itemsize
    o_bytes = jnp.dtype(out_dtype).itemsize
    need_acc = jnp.dtype(out_dtype) != jnp.dtype(jnp.float32)

    # --- K padding only when dim is not lane-aligned (rare) ----------------
    dim_p = _round_up(dim, 128)
    if dim_p != dim:
        x_flat = jnp.pad(x_flat, ((0, 0), (0, dim_p - dim)))
        w_t = jnp.pad(w_t, ((0, dim_p - dim), (0, 0)))

    # --- N tile: lane-dense, capped so huge heads stay VMEM-feasible -------
    tn_eff = min(_round_up(num_labels, 128), _round_up(tn, 128))
    gn = _cdiv(num_labels, tn_eff)

    # --- M tile: balance batch over cdiv(B, tm) tiles, no x padding --------
    sub = 8 if x_bytes >= 4 else (16 if x_bytes == 2 else 32)
    tm_eff = min(tm, _round_up(B, sub))
    n_m_tiles = _cdiv(B, tm_eff)
    tm_eff = _round_up(_cdiv(B, n_m_tiles), sub)   # bound last-tile waste
    # Give the v7x megacore something to shard when there is a single tile.
    if n_m_tiles * gn == 1 and B >= 4 * sub:
        tm_eff = _round_up(_cdiv(B, 2), sub)
    gm = _cdiv(B, tm_eff)

    # --- K tile: largest 128-multiple divisor of dim_p within the budget ---
    tk_eff = 128
    cand = min(dim_p, _round_up(max(tk, 128), 128))
    cand = dim_p  # start from a single K step; the budget check caps it
    while cand >= 128:
        if dim_p % cand == 0 and _vmem_footprint(
                tm_eff, cand, tn_eff, x_bytes, w_bytes, o_bytes,
                need_acc) <= _VMEM_TILE_BUDGET:
            tk_eff = cand
            break
        cand -= 128
    gk = dim_p // tk_eff

    footprint = _vmem_footprint(tm_eff, tk_eff, tn_eff, x_bytes, w_bytes,
                                o_bytes, need_acc)
    vmem_limit = int(min(64 * 1024 * 1024, max(2 * footprint, 32 * 1024 * 1024)))

    cost = pl.CostEstimate(
        flops=2 * B * dim_p * num_labels,
        transcendentals=0,
        bytes_accessed=(B * dim_p * x_bytes + dim_p * num_labels * w_bytes
                        + num_labels * 4 + B * num_labels * o_bytes),
    )

    in_specs = [
        pl.BlockSpec((tm_eff, tk_eff), lambda i, j, k: (i, k)),   # x
        pl.BlockSpec((tk_eff, tn_eff), lambda i, j, k: (k, j)),   # W (dim, N)
        pl.BlockSpec((1, tn_eff), lambda i, j, k: (0, j)),        # bias
    ]
    out_specs = pl.BlockSpec((tm_eff, tn_eff), lambda i, j, k: (i, j))

    if need_acc:
        kernel = _linear_kernel_acc
        scratch = [pltpu.VMEM((tm_eff, tn_eff), jnp.float32)]
    else:
        kernel = _linear_kernel_direct
        scratch = []

    out = pl.pallas_call(
        kernel,
        out_shape=jax.ShapeDtypeStruct((B, num_labels), out_dtype),
        grid_spec=pltpu.PrefetchScalarGridSpec(
            num_scalar_prefetch=0,
            grid=(gm, gn, gk),
            in_specs=in_specs,
            out_specs=out_specs,
            scratch_shapes=scratch,
        ),
        compiler_params=pltpu.CompilerParams(
            dimension_semantics=("parallel", "parallel", "arbitrary"),
            vmem_limit_bytes=vmem_limit,
        ),
        cost_estimate=cost,
    )(x_flat, w_t, b2)

    return out


def init_linear_classifier_params(key, dim, num_labels):
    """Deterministic init matching the PyTorch module:
    weight ~ N(0, 0.01), bias = 0."""
    (w_key,) = jax.random.split(key, 1)
    weight = 0.01 * jax.random.normal(w_key, (num_labels, dim), dtype=jnp.float32)
    bias = jnp.zeros((num_labels,), dtype=jnp.float32)
    return weight, bias


if __name__ == "__main__":
    key = jax.random.PRNGKey(0)
    k_x, k_p, k_x2 = jax.random.split(key, 3)

    # Small but representative: frozen NCHW features (B=8, C=4, H=16, W=16)
    # -> dim = 1024, num_labels = 16 (partial last-lane output tile).
    B, C, H, W = 8, 4, 16, 16
    dim = C * H * W
    num_labels = 16

    x = jax.random.normal(k_x, (B, C, H, W), dtype=jnp.float32)
    weight, bias = init_linear_classifier_params(k_p, dim, num_labels)

    # Reference in plain JAX (same semantics as torch nn.Linear), f32.
    ref = jax.lax.dot_general(
        x.reshape(B, -1), weight, (((1,), (1,)), ((), ())),
        precision=jax.lax.Precision.HIGHEST,
    ) + bias

    # 1) f32 path (matches the PyTorch module).
    out = jax.block_until_ready(linear_classifier_forward(x, weight, bias))
    assert out.shape == (B, num_labels) and out.dtype == jnp.float32
    assert jnp.allclose(out, ref, atol=1e-3, rtol=1e-3)

    # 2) bf16 MXU operands (recommended on v6e/v7x), f32 accumulate, f32 out.
    out_bf = jax.block_until_ready(
        linear_classifier_forward(x, weight, bias, compute_dtype=jnp.bfloat16))
    assert out_bf.shape == (B, num_labels) and out_bf.dtype == jnp.float32
    assert float(jnp.max(jnp.abs(out_bf - ref))) < 3e-2

    # 3) bf16 activations end-to-end (exercises the scratch-accumulator path).
    B2 = 16
    x2 = jax.random.normal(k_x2, (B2, C, H, W), dtype=jnp.float32)
    ref2 = jax.lax.dot_general(
        x2.reshape(B2, -1), weight, (((1,), (1,)), ((), ())),
        precision=jax.lax.Precision.HIGHEST,
    ) + bias
    out2 = jax.block_until_ready(
        linear_classifier_forward(x2.astype(jnp.bfloat16), weight, bias,
                                  compute_dtype=jnp.bfloat16))
    assert out2.shape == (B2, num_labels) and out2.dtype == jnp.bfloat16
    assert float(jnp.max(jnp.abs(out2.astype(jnp.float32) - ref2))) < 5e-2

    print("KERNEL_OK")
</pallas_src>

<mosaic_0001>
module attributes {stable_mosaic.version = 11 : i64} {
  func.func @_linear_kernel_direct(%arg0: i32, %arg1: i32, %arg2: i32, %arg3: memref<8x1024xf32, #tpu.memory_space<vmem>>, %arg4: memref<1024x128xf32, #tpu.memory_space<vmem>>, %arg5: memref<1x128xf32, #tpu.memory_space<vmem>>, %arg6: memref<8x128xf32, #tpu.memory_space<vmem>>) attributes {dimension_semantics = [#tpu.dimension_semantics<parallel>, #tpu.dimension_semantics<parallel>, #tpu.dimension_semantics<arbitrary>], iteration_bounds = array<i64: 1, 1, 1>, scalar_prefetch = 0 : i64, scratch_operands = 0 : i64, tpu.core_type = #tpu.core_type<tc>, window_params = [{transform_indices = @transform_0, window_bounds = array<i64: 8, 1024>}, {transform_indices = @transform_1, window_bounds = array<i64: 1024, 128>}, {transform_indices = @transform_2, window_bounds = array<i64: 1, 128>}, {transform_indices = @transform_3, window_bounds = array<i64: 8, 128>}]} {
    %c0_i32 = arith.constant 0 : i32
    %0 = arith.cmpi eq, %arg2, %c0_i32 : i32
    %1 = arith.extui %0 : i1 to i32
    %c0_i32_0 = arith.constant 0 : i32
    %2 = arith.cmpi ne, %1, %c0_i32_0 : i32
    scf.if %2 {
      %c0_8 = arith.constant 0 : index
      %c0_9 = arith.constant 0 : index
      %9 = vector.load %arg5[%c0_8, %c0_9] : memref<1x128xf32, #tpu.memory_space<vmem>>, vector<1x128xf32>
      %10 = vector.shape_cast %9 : vector<1x128xf32> to vector<1x128xf32>
      %11 = vector.broadcast %10 : vector<1x128xf32> to vector<8x128xf32>
      %c0_10 = arith.constant 0 : index
      %c0_11 = arith.constant 0 : index
      %12 = vector.load %arg6[%c0_10, %c0_11] : memref<8x128xf32, #tpu.memory_space<vmem>>, vector<8x128xf32>
      tpu.vector_store %arg6[%c0_10, %c0_11], %11 {strides = array<i32>} : memref<8x128xf32, #tpu.memory_space<vmem>>, vector<8x128xf32>,
    } else {
    }
    %c0 = arith.constant 0 : index
    %c0_1 = arith.constant 0 : index
    %3 = vector.load %arg6[%c0, %c0_1] : memref<8x128xf32, #tpu.memory_space<vmem>>, vector<8x128xf32>
    %c0_2 = arith.constant 0 : index
    %c0_3 = arith.constant 0 : index
    %4 = vector.load %arg3[%c0_2, %c0_3] : memref<8x1024xf32, #tpu.memory_space<vmem>>, vector<8x1024xf32>
    %c0_4 = arith.constant 0 : index
    %c0_5 = arith.constant 0 : index
    %5 = vector.load %arg4[%c0_4, %c0_5] : memref<1024x128xf32, #tpu.memory_space<vmem>>, vector<1024x128xf32>
    %cst = arith.constant dense<0.000000e+00> : vector<8x128xf32>
    %6 = tpu.matmul %4, %5, %cst {dimension_numbers = #tpu.dot_dimension_numbers<[1], [0], [0], [1], [0, 0, 1, 1], [], []>} : vector<8x1024xf32>, vector<1024x128xf32>, vector<8x128xf32> -> vector<8x128xf32>
    %7 = arith.addf %3, %6 : vector<8x128xf32>
    %c0_6 = arith.constant 0 : index
    %c0_7 = arith.constant 0 : index
    %8 = vector.load %arg6[%c0_6, %c0_7] : memref<8x128xf32, #tpu.memory_space<vmem>>, vector<8x128xf32>
    tpu.vector_store %arg6[%c0_6, %c0_7], %7 {strides = array<i32>} : memref<8x128xf32, #tpu.memory_space<vmem>>, vector<8x128xf32>,
    return
  }
  func.func @transform_0(%arg0: i32, %arg1: i32, %arg2: i32) -> (i32, i32) {
    %c0_i32 = arith.constant 0 : i32
    return %arg0, %arg2 : i32, i32
  }
  func.func @transform_1(%arg0: i32, %arg1: i32, %arg2: i32) -> (i32, i32) {
    %c0_i32 = arith.constant 0 : i32
    return %arg2, %arg1 : i32, i32
  }
  func.func @transform_2(%arg0: i32, %arg1: i32, %arg2: i32) -> (i32, i32) {
    %c0_i32 = arith.constant 0 : i32
    %c0_i32_0 = arith.constant 0 : i32
    return %c0_i32, %arg1 : i32, i32
  }
  func.func @transform_3(%arg0: i32, %arg1: i32, %arg2: i32) -> (i32, i32) {
    %c0_i32 = arith.constant 0 : i32
    return %arg0, %arg1 : i32, i32
  }
}

</mosaic_0001>

<llo_original>
// kernel: tpu_custom_call.1
$region0: #{tpu_custom_call.1}
  #allocation0 [shape = 'u32[]', space=smem, size = 0x4, offset = 0x4, fixed_abs, tag = 'smem constant byte address 0x4 - core index']
  #allocation1 [shape = 'u32[144,128]{1,0:T(1,128)}', space=vmem, size = 0x12000, scoped, tag = 'internal scratch']
  %s0 = inlined_call_operand.vmem [shape: f32[8,1024], index: 0, kind: input, shape index: {}]
  %s1 = inlined_call_operand.vmem [shape: f32[1024,16], index: 1, kind: input, shape index: {}]
  %s2 = inlined_call_operand.vmem [shape: f32[1,16], index: 2, kind: input, shape index: {}]
  %s3 = inlined_call_operand.hbm [shape: f32[8,16], index: 3, kind: output, shape index: {}]
  %s4 = sld [smem:[#allocation0]]
  $region26: #{tpu_custom_call.1} parent=0
    _
  %s6 = ssub.s32 1, %s4
  %s7 = scalar_select 0, %s6, %s4
  $region1: #{tpu_custom_call.1} parent=0
    #allocation2 [shape = 'u8[4096]{0}', space=vmem, size = 0x1000, scoped, tag = 'output window, operand 0, single buffered']
    #allocation3 [shape = 's32[1]{0}', space=sflag, size = 0x4, scoped, tag = 'scoped memory for tpu_custom_call.1']
    %8 = vsyncpa [#allocation3], 0
    // Predicated region
    $region2: #{tpu_custom_call.1} parent=1 // pred_check
      _
    $region3: #{tpu_custom_call.1} parent=1 // pred_check_branch
      %10 = sbr.rel (0) target = $region5
    $region4: #{tpu_custom_call.1} parent=1 // pred_region
      _
    $region5: #{tpu_custom_call.1} parent=1 // pred_fallthru
      _
    // Predicated region
    $region6: #{tpu_custom_call.1} parent=1 // pred_check
      _
    $region7: #{tpu_custom_call.1} parent=1 // pred_check_branch
      %12 = sbr.rel (0) target = $region9
    $region8: #{tpu_custom_call.1} parent=1 // pred_region
      _
    $region9: #{tpu_custom_call.1} parent=1 // pred_fallthru
      _
    // Predicated region
    $region10: #{tpu_custom_call.1} parent=1 // pred_check
      _
    $region11: #{tpu_custom_call.1} parent=1 // pred_check_branch
      %14 = sbr.rel (0) target = $region13
    $region12: #{tpu_custom_call.1} parent=1 // pred_region
      _
    $region13: #{tpu_custom_call.1} parent=1 // pred_fallthru
      _
    %p15 = scmp.eq.s32.totalorder 0, 0
    // Predicated region
    $region14: #{tpu_custom_call.1} parent=1 // pred_check
      %p16 = pneg %p15
    $region15: #{tpu_custom_call.1} parent=1 // pred_check_branch
      %18 = sbr.rel (%p16) target = $region17
    $region16: #{tpu_custom_call.1} parent=1 // pred_region
      %v19 = vld [vmem:[%s2] sm:$0x1]
      %v21 = vlaneseq
      %v22 = vshrl.u32 %v21, 7
      %v23 = vsub.s32 0, %v22
      %v24 = vrot.slane %v19, %v23
      %26 = vst [vmem:[#allocation2] sm:$0xff] %v24
    $region17: #{tpu_custom_call.1} parent=1 // pred_fallthru
      _
    %v27 = vld [vmem:[#allocation2] sm:$0xff]
    %v28 = vld [vmem:[%s0] sm:$0xff]
    %v29 = vld [vmem:[%s0 + $0x8] sm:$0xff]
    %v30 = vld [vmem:[%s0 + $0x10] sm:$0xff]
    %v31 = vld [vmem:[%s0 + $0x18] sm:$0xff]
    %v32 = vld [vmem:[%s0 + $0x20] sm:$0xff]
    %v33 = vld [vmem:[%s0 + $0x28] sm:$0xff]
    %v34 = vld [vmem:[%s0 + $0x30] sm:$0xff]
    %v35 = vld [vmem:[%s0 + $0x38] sm:$0xff]
    %v36 = vld [vmem:[%s1] sm:$0xff]
    %v37 = vld [vmem:[%s1 + $0x8] sm:$0xff]
    %v38 = vld [vmem:[%s1 + $0x10] sm:$0xff]
    %v39 = vld [vmem:[%s1 + $0x18] sm:$0xff]
    %v40 = vld [vmem:[%s1 + $0x20] sm:$0xff]
    %v41 = vld [vmem:[%s1 + $0x28] sm:$0xff]
    %v42 = vld [vmem:[%s1 + $0x30] sm:$0xff]
    %v43 = vld [vmem:[%s1 + $0x38] sm:$0xff]
    %v44 = vld [vmem:[%s1 + $0x40] sm:$0xff]
    %v45 = vld [vmem:[%s1 + $0x48] sm:$0xff]
    %v46 = vld [vmem:[%s1 + $0x50] sm:$0xff]
    %v47 = vld [vmem:[%s1 + $0x58] sm:$0xff]
    %v48 = vld [vmem:[%s1 + $0x60] sm:$0xff]
    %v49 = vld [vmem:[%s1 + $0x68] sm:$0xff]
    %v50 = vld [vmem:[%s1 + $0x70] sm:$0xff]
    %v51 = vld [vmem:[%s1 + $0x78] sm:$0xff]
    %v52 = vld [vmem:[%s1 + $0x80] sm:$0xff]
    %v53 = vld [vmem:[%s1 + $0x88] sm:$0xff]
    %v54 = vld [vmem:[%s1 + $0x90] sm:$0xff]
    %v55 = vld [vmem:[%s1 + $0x98] sm:$0xff]
    %v56 = vld [vmem:[%s1 + $0xa0] sm:$0xff]
    %v57 = vld [vmem:[%s1 + $0xa8] sm:$0xff]
    %v58 = vld [vmem:[%s1 + $0xb0] sm:$0xff]
    %v59 = vld [vmem:[%s1 + $0xb8] sm:$0xff]
    %v60 = vld [vmem:[%s1 + $0xc0] sm:$0xff]
    %v61 = vld [vmem:[%s1 + $0xc8] sm:$0xff]
    %v62 = vld [vmem:[%s1 + $0xd0] sm:$0xff]
    %v63 = vld [vmem:[%s1 + $0xd8] sm:$0xff]
    %v64 = vld [vmem:[%s1 + $0xe0] sm:$0xff]
    %v65 = vld [vmem:[%s1 + $0xe8] sm:$0xff]
    %v66 = vld [vmem:[%s1 + $0xf0] sm:$0xff]
    %v67 = vld [vmem:[%s1 + $0xf8] sm:$0xff]
    %v68 = vld [vmem:[%s1 + $0x100] sm:$0xff]
    %v69 = vld [vmem:[%s1 + $0x108] sm:$0xff]
    %v70 = vld [vmem:[%s1 + $0x110] sm:$0xff]
    %v71 = vld [vmem:[%s1 + $0x118] sm:$0xff]
    %v72 = vld [vmem:[%s1 + $0x120] sm:$0xff]
    %v73 = vld [vmem:[%s1 + $0x128] sm:$0xff]
    %v74 = vld [vmem:[%s1 + $0x130] sm:$0xff]
    %v75 = vld [vmem:[%s1 + $0x138] sm:$0xff]
    %v76 = vld [vmem:[%s1 + $0x140] sm:$0xff]
    %v77 = vld [vmem:[%s1 + $0x148] sm:$0xff]
    %v78 = vld [vmem:[%s1 + $0x150] sm:$0xff]
    %v79 = vld [vmem:[%s1 + $0x158] sm:$0xff]
    %v80 = vld [vmem:[%s1 + $0x160] sm:$0xff]
    %v81 = vld [vmem:[%s1 + $0x168] sm:$0xff]
    %v82 = vld [vmem:[%s1 + $0x170] sm:$0xff]
    %v83 = vld [vmem:[%s1 + $0x178] sm:$0xff]
    %v84 = vld [vmem:[%s1 + $0x180] sm:$0xff]
    %v85 = vld [vmem:[%s1 + $0x188] sm:$0xff]
    %v86 = vld [vmem:[%s1 + $0x190] sm:$0xff]
    %v87 = vld [vmem:[%s1 + $0x198] sm:$0xff]
    %v88 = vld [vmem:[%s1 + $0x1a0] sm:$0xff]
    %v89 = vld [vmem:[%s1 + $0x1a8] sm:$0xff]
    %v90 = vld [vmem:[%s1 + $0x1b0] sm:$0xff]
    %v91 = vld [vmem:[%s1 + $0x1b8] sm:$0xff]
    %v92 = vld [vmem:[%s1 + $0x1c0] sm:$0xff]
    %v93 = vld [vmem:[%s1 + $0x1c8] sm:$0xff]
    %v94 = vld [vmem:[%s1 + $0x1d0] sm:$0xff]
    %v95 = vld [vmem:[%s1 + $0x1d8] sm:$0xff]
    %v96 = vld [vmem:[%s1 + $0x1e0] sm:$0xff]
    %v97 = vld [vmem:[%s1 + $0x1e8] sm:$0xff]
    %v98 = vld [vmem:[%s1 + $0x1f0] sm:$0xff]
    %v99 = vld [vmem:[%s1 + $0x1f8] sm:$0xff]
    %v100 = vld [vmem:[%s1 + $0x200] sm:$0xff]
    %v101 = vld [vmem:[%s1 + $0x208] sm:$0xff]
    %v102 = vld [vmem:[%s1 + $0x210] sm:$0xff]
    %v103 = vld [vmem:[%s1 + $0x218] sm:$0xff]
    %v104 = vld [vmem:[%s1 + $0x220] sm:$0xff]
    %v105 = vld [vmem:[%s1 + $0x228] sm:$0xff]
    %v106 = vld [vmem:[%s1 + $0x230] sm:$0xff]
    %v107 = vld [vmem:[%s1 + $0x238] sm:$0xff]
    %v108 = vld [vmem:[%s1 + $0x240] sm:$0xff]
    %v109 = vld [vmem:[%s1 + $0x248] sm:$0xff]
    %v110 = vld [vmem:[%s1 + $0x250] sm:$0xff]
    %v111 = vld [vmem:[%s1 + $0x258] sm:$0xff]
    %v112 = vld [vmem:[%s1 + $0x260] sm:$0xff]
    %v113 = vld [vmem:[%s1 + $0x268] sm:$0xff]
    %v114 = vld [vmem:[%s1 + $0x270] sm:$0xff]
    %v115 = vld [vmem:[%s1 + $0x278] sm:$0xff]
    %v116 = vld [vmem:[%s1 + $0x280] sm:$0xff]
    %v117 = vld [vmem:[%s1 + $0x288] sm:$0xff]
    %v118 = vld [vmem:[%s1 + $0x290] sm:$0xff]
    %v119 = vld [vmem:[%s1 + $0x298] sm:$0xff]
    %v120 = vld [vmem:[%s1 + $0x2a0] sm:$0xff]
    %v121 = vld [vmem:[%s1 + $0x2a8] sm:$0xff]
    %v122 = vld [vmem:[%s1 + $0x2b0] sm:$0xff]
    %v123 = vld [vmem:[%s1 + $0x2b8] sm:$0xff]
    %v124 = vld [vmem:[%s1 + $0x2c0] sm:$0xff]
    %v125 = vld [vmem:[%s1 + $0x2c8] sm:$0xff]
    %v126 = vld [vmem:[%s1 + $0x2d0] sm:$0xff]
    %v127 = vld [vmem:[%s1 + $0x2d8] sm:$0xff]
    %v128 = vld [vmem:[%s1 + $0x2e0] sm:$0xff]
    %v129 = vld [vmem:[%s1 + $0x2e8] sm:$0xff]
    %v130 = vld [vmem:[%s1 + $0x2f0] sm:$0xff]
    %v131 = vld [vmem:[%s1 + $0x2f8] sm:$0xff]
    %v132 = vld [vmem:[%s1 + $0x300] sm:$0xff]
    %v133 = vld [vmem:[%s1 + $0x308] sm:$0xff]
    %v134 = vld [vmem:[%s1 + $0x310] sm:$0xff]
    %v135 = vld [vmem:[%s1 + $0x318] sm:$0xff]
    %v136 = vld [vmem:[%s1 + $0x320] sm:$0xff]
    %v137 = vld [vmem:[%s1 + $0x328] sm:$0xff]
    %v138 = vld [vmem:[%s1 + $0x330] sm:$0xff]
    %v139 = vld [vmem:[%s1 + $0x338] sm:$0xff]
    %v140 = vld [vmem:[%s1 + $0x340] sm:$0xff]
    %v141 = vld [vmem:[%s1 + $0x348] sm:$0xff]
    %v142 = vld [vmem:[%s1 + $0x350] sm:$0xff]
    %v143 = vld [vmem:[%s1 + $0x358] sm:$0xff]
    %v144 = vld [vmem:[%s1 + $0x360] sm:$0xff]
    %v145 = vld [vmem:[%s1 + $0x368] sm:$0xff]
    %v146 = vld [vmem:[%s1 + $0x370] sm:$0xff]
    %v147 = vld [vmem:[%s1 + $0x378] sm:$0xff]
    %v148 = vld [vmem:[%s1 + $0x380] sm:$0xff]
    %v149 = vld [vmem:[%s1 + $0x388] sm:$0xff]
    %v150 = vld [vmem:[%s1 + $0x390] sm:$0xff]
    %v151 = vld [vmem:[%s1 + $0x398] sm:$0xff]
    %v152 = vld [vmem:[%s1 + $0x3a0] sm:$0xff]
    %v153 = vld [vmem:[%s1 + $0x3a8] sm:$0xff]
    %v154 = vld [vmem:[%s1 + $0x3b0] sm:$0xff]
    %v155 = vld [vmem:[%s1 + $0x3b8] sm:$0xff]
    %v156 = vld [vmem:[%s1 + $0x3c0] sm:$0xff]
    %v157 = vld [vmem:[%s1 + $0x3c8] sm:$0xff]
    %v158 = vld [vmem:[%s1 + $0x3d0] sm:$0xff]
    %v159 = vld [vmem:[%s1 + $0x3d8] sm:$0xff]
    %v160 = vld [vmem:[%s1 + $0x3e0] sm:$0xff]
    %v161 = vld [vmem:[%s1 + $0x3e8] sm:$0xff]
    %v162 = vld [vmem:[%s1 + $0x3f0] sm:$0xff]
    %v163 = vld [vmem:[%s1 + $0x3f8] sm:$0xff]
    %164 = vmatprep.subr.mxu0 0.0
    %165 = vmatpush1.msra.mxu0 %v36
    %166 = vmatprep.subr.mxu0 0.0
    %167 = vmatpush1.msra.mxu0 %v37
    %168 = vmatprep.subr.mxu0 0.0
    %169 = vmatpush1.msra.mxu0 %v38
    %170 = vmatprep.subr.mxu0 0.0
    %171 = vmatpush1.msra.mxu0 %v39
    %172 = vmatprep.subr.mxu0 0.0
    %173 = vmatpush1.msra.mxu0 %v40
    %174 = vmatprep.subr.mxu0 0.0
    %175 = vmatpush1.msra.mxu0 %v41
    %176 = vmatprep.subr.mxu0 0.0
    %177 = vmatpush1.msra.mxu0 %v42
    %178 = vmatprep.subr.mxu0 0.0
    %179 = vmatpush1.msra.mxu0 %v43
    %180 = vmatprep.subr.mxu0 0.0
    %181 = vmatpush1.msra.mxu0 %v44
    %182 = vmatprep.subr.mxu0 0.0
    %183 = vmatpush1.msra.mxu0 %v45
    %184 = vmatprep.subr.mxu0 0.0
    %185 = vmatpush1.msra.mxu0 %v46
    %186 = vmatprep.subr.mxu0 0.0
    %187 = vmatpush1.msra.mxu0 %v47
    %188 = vmatprep.subr.mxu0 0.0
    %189 = vmatpush1.msra.mxu0 %v48
    %190 = vmatprep.subr.mxu0 0.0
    %191 = vmatpush1.msra.mxu0 %v49
    %192 = vmatprep.subr.mxu0 0.0
    %193 = vmatpush1.msra.mxu0 %v50
    %194 = vmatprep.subr.mxu0 0.0
    %195 = vmatpush1.msra.mxu0 %v51
    %196 = vmatprep.subr.mxu0 0.0
    %197 = vmatpush1.msra.mxu0 %v52
    %198 = vmatprep.subr.mxu0 0.0
    %199 = vmatpush1.msra.mxu0 %v53
    %200 = vmatprep.subr.mxu0 0.0
    %201 = vmatpush1.msra.mxu0 %v54
    %202 = vmatprep.subr.mxu0 0.0
    %203 = vmatpush1.msra.mxu0 %v55
    %204 = vmatprep.subr.mxu0 0.0
    %205 = vmatpush1.msra.mxu0 %v56
    %206 = vmatprep.subr.mxu0 0.0
    %207 = vmatpush1.msra.mxu0 %v57
    %208 = vmatprep.subr.mxu0 0.0
    %209 = vmatpush1.msra.mxu0 %v58
    %210 = vmatprep.subr.mxu0 0.0
    %211 = vmatpush1.msra.mxu0 %v59
    %212 = vmatprep.subr.mxu0 0.0
    %213 = vmatpush1.msra.mxu0 %v60
    %214 = vmatprep.subr.mxu0 0.0
    %215 = vmatpush1.msra.mxu0 %v61
    %216 = vmatprep.subr.mxu0 0.0
    %217 = vmatpush1.msra.mxu0 %v62
    %218 = vmatprep.subr.mxu0 0.0
    %219 = vmatpush1.msra.mxu0 %v63
    %220 = vmatprep.subr.mxu0 0.0
    %221 = vmatpush1.msra.mxu0 %v64
    %222 = vmatprep.subr.mxu0 0.0
    %223 = vmatpush1.msra.mxu0 %v65
    %224 = vmatprep.subr.mxu0 0.0
    %225 = vmatpush1.msra.mxu0 %v66
    %226 = vmatprep.subr.mxu0 0.0
    %227 = vmatpush1.msra.mxu0 %v67
    %228 = vmatprep.mubr.f32.mxu0 %v29
    %229 = vmatmul.mubr.f32.gmra.mrb[0].mxu0 %v28
    %v230 = vpop.f32.mrb[0].mxu0
    %v231 = vadd.f32 0.0, %v230
    %v232 = vpop.f32.mrb[0].mxu0
    %233 = vdwg.mxu0
    %234 = vmatprep.subr.mxu0 0.0
    %235 = vmatpush1.msra.mxu0 %v68
    %236 = vmatprep.subr.mxu0 0.0
    %237 = vmatpush1.msra.mxu0 %v69
    %238 = vmatprep.subr.mxu0 0.0
    %239 = vmatpush1.msra.mxu0 %v70
    %240 = vmatprep.subr.mxu0 0.0
    %241 = vmatpush1.msra.mxu0 %v71
    %242 = vmatprep.subr.mxu0 0.0
    %243 = vmatpush1.msra.mxu0 %v72
    %244 = vmatprep.subr.mxu0 0.0
    %245 = vmatpush1.msra.mxu0 %v73
    %246 = vmatprep.subr.mxu0 0.0
    %247 = vmatpush1.msra.mxu0 %v74
    %248 = vmatprep.subr.mxu0 0.0
    %249 = vmatpush1.msra.mxu0 %v75
    %250 = vmatprep.subr.mxu0 0.0
    %251 = vmatpush1.msra.mxu0 %v76
    %252 = vmatprep.subr.mxu0 0.0
    %253 = vmatpush1.msra.mxu0 %v77
    %254 = vmatprep.subr.mxu0 0.0
    %255 = vmatpush1.msra.mxu0 %v78
    %256 = vmatprep.subr.mxu0 0.0
    %257 = vmatpush1.msra.mxu0 %v79
    %258 = vmatprep.subr.mxu0 0.0
    %259 = vmatpush1.msra.mxu0 %v80
    %260 = vmatprep.subr.mxu0 0.0
    %261 = vmatpush1.msra.mxu0 %v81
    %262 = vmatprep.subr.mxu0 0.0
    %263 = vmatpush1.msra.mxu0 %v82
    %264 = vmatprep.subr.mxu0 0.0
    %265 = vmatpush1.msra.mxu0 %v83
    %266 = vmatprep.subr.mxu0 0.0
    %267 = vmatpush1.msra.mxu0 %v84
    %268 = vmatprep.subr.mxu0 0.0
    %269 = vmatpush1.msra.mxu0 %v85
    %270 = vmatprep.subr.mxu0 0.0
    %271 = vmatpush1.msra.mxu0 %v86
    %272 = vmatprep.subr.mxu0 0.0
    %273 = vmatpush1.msra.mxu0 %v87
    %274 = vmatprep.subr.mxu0 0.0
    %275 = vmatpush1.msra.mxu0 %v88
    %276 = vmatprep.subr.mxu0 0.0
    %277 = vmatpush1.msra.mxu0 %v89
    %278 = vmatprep.subr.mxu0 0.0
    %279 = vmatpush1.msra.mxu0 %v90
    %280 = vmatprep.subr.mxu0 0.0
    %281 = vmatpush1.msra.mxu0 %v91
    %282 = vmatprep.subr.mxu0 0.0
    %283 = vmatpush1.msra.mxu0 %v92
    %284 = vmatprep.subr.mxu0 0.0
    %285 = vmatpush1.msra.mxu0 %v93
    %286 = vmatprep.subr.mxu0 0.0
    %287 = vmatpush1.msra.mxu0 %v94
    %288 = vmatprep.subr.mxu0 0.0
    %289 = vmatpush1.msra.mxu0 %v95
    %290 = vmatprep.subr.mxu0 0.0
    %291 = vmatpush1.msra.mxu0 %v96
    %292 = vmatprep.subr.mxu0 0.0
    %293 = vmatpush1.msra.mxu0 %v97
    %294 = vmatprep.subr.mxu0 0.0
    %295 = vmatpush1.msra.mxu0 %v98
    %296 = vmatprep.subr.mxu0 0.0
    %297 = vmatpush1.msra.mxu0 %v99
    %298 = vmatprep.mubr.f32.mxu0 %v31
    %299 = vmatmul.mubr.f32.gmra.mrb[0].mxu0 %v30
    %v300 = vpop.f32.mrb[0].mxu0
    %v301 = vadd.f32 %v231, %v300
    %v302 = vpop.f32.mrb[0].mxu0
    %303 = vdwg.mxu0
    %304 = vmatprep.subr.mxu0 0.0
    %305 = vmatpush1.msra.mxu0 %v100
    %306 = vmatprep.subr.mxu0 0.0
    %307 = vmatpush1.msra.mxu0 %v101
    %308 = vmatprep.subr.mxu0 0.0
    %309 = vmatpush1.msra.mxu0 %v102
    %310 = vmatprep.subr.mxu0 0.0
    %311 = vmatpush1.msra.mxu0 %v103
    %312 = vmatprep.subr.mxu0 0.0
    %313 = vmatpush1.msra.mxu0 %v104
    %314 = vmatprep.subr.mxu0 0.0
    %315 = vmatpush1.msra.mxu0 %v105
    %316 = vmatprep.subr.mxu0 0.0
    %317 = vmatpush1.msra.mxu0 %v106
    %318 = vmatprep.subr.mxu0 0.0
    %319 = vmatpush1.msra.mxu0 %v107
    %320 = vmatprep.subr.mxu0 0.0
    %321 = vmatpush1.msra.mxu0 %v108
    %322 = vmatprep.subr.mxu0 0.0
    %323 = vmatpush1.msra.mxu0 %v109
    %324 = vmatprep.subr.mxu0 0.0
    %325 = vmatpush1.msra.mxu0 %v110
    %326 = vmatprep.subr.mxu0 0.0
    %327 = vmatpush1.msra.mxu0 %v111
    %328 = vmatprep.subr.mxu0 0.0
    %329 = vmatpush1.msra.mxu0 %v112
    %330 = vmatprep.subr.mxu0 0.0
    %331 = vmatpush1.msra.mxu0 %v113
    %332 = vmatprep.subr.mxu0 0.0
    %333 = vmatpush1.msra.mxu0 %v114
    %334 = vmatprep.subr.mxu0 0.0
    %335 = vmatpush1.msra.mxu0 %v115
    %336 = vmatprep.subr.mxu0 0.0
    %337 = vmatpush1.msra.mxu0 %v116
    %338 = vmatprep.subr.mxu0 0.0
    %339 = vmatpush1.msra.mxu0 %v117
    %340 = vmatprep.subr.mxu0 0.0
    %341 = vmatpush1.msra.mxu0 %v118
    %342 = vmatprep.subr.mxu0 0.0
    %343 = vmatpush1.msra.mxu0 %v119
    %344 = vmatprep.subr.mxu0 0.0
    %345 = vmatpush1.msra.mxu0 %v120
    %346 = vmatprep.subr.mxu0 0.0
    %347 = vmatpush1.msra.mxu0 %v121
    %348 = vmatprep.subr.mxu0 0.0
    %349 = vmatpush1.msra.mxu0 %v122
    %350 = vmatprep.subr.mxu0 0.0
    %351 = vmatpush1.msra.mxu0 %v123
    %352 = vmatprep.subr.mxu0 0.0
    %353 = vmatpush1.msra.mxu0 %v124
    %354 = vmatprep.subr.mxu0 0.0
    %355 = vmatpush1.msra.mxu0 %v125
    %356 = vmatprep.subr.mxu0 0.0
    %357 = vmatpush1.msra.mxu0 %v126
    %358 = vmatprep.subr.mxu0 0.0
    %359 = vmatpush1.msra.mxu0 %v127
    %360 = vmatprep.subr.mxu0 0.0
    %361 = vmatpush1.msra.mxu0 %v128
    %362 = vmatprep.subr.mxu0 0.0
    %363 = vmatpush1.msra.mxu0 %v129
    %364 = vmatprep.subr.mxu0 0.0
    %365 = vmatpush1.msra.mxu0 %v130
    %366 = vmatprep.subr.mxu0 0.0
    %367 = vmatpush1.msra.mxu0 %v131
    %368 = vmatprep.mubr.f32.mxu0 %v33
    %369 = vmatmul.mubr.f32.gmra.mrb[0].mxu0 %v32
    %v370 = vpop.f32.mrb[0].mxu0
    %v371 = vadd.f32 %v301, %v370
    %v372 = vpop.f32.mrb[0].mxu0
    %373 = vdwg.mxu0
    %374 = vmatprep.subr.mxu0 0.0
    %375 = vmatpush1.msra.mxu0 %v132
    %376 = vmatprep.subr.mxu0 0.0
    %377 = vmatpush1.msra.mxu0 %v133
    %378 = vmatprep.subr.mxu0 0.0
    %379 = vmatpush1.msra.mxu0 %v134
    %380 = vmatprep.subr.mxu0 0.0
    %381 = vmatpush1.msra.mxu0 %v135
    %382 = vmatprep.subr.mxu0 0.0
    %383 = vmatpush1.msra.mxu0 %v136
    %384 = vmatprep.subr.mxu0 0.0
    %385 = vmatpush1.msra.mxu0 %v137
    %386 = vmatprep.subr.mxu0 0.0
    %387 = vmatpush1.msra.mxu0 %v138
    %388 = vmatprep.subr.mxu0 0.0
    %389 = vmatpush1.msra.mxu0 %v139
    %390 = vmatprep.subr.mxu0 0.0
    %391 = vmatpush1.msra.mxu0 %v140
    %392 = vmatprep.subr.mxu0 0.0
    %393 = vmatpush1.msra.mxu0 %v141
    %394 = vmatprep.subr.mxu0 0.0
    %395 = vmatpush1.msra.mxu0 %v142
    %396 = vmatprep.subr.mxu0 0.0
    %397 = vmatpush1.msra.mxu0 %v143
    %398 = vmatprep.subr.mxu0 0.0
    %399 = vmatpush1.msra.mxu0 %v144
    %400 = vmatprep.subr.mxu0 0.0
    %401 = vmatpush1.msra.mxu0 %v145
    %402 = vmatprep.subr.mxu0 0.0
    %403 = vmatpush1.msra.mxu0 %v146
    %404 = vmatprep.subr.mxu0 0.0
    %405 = vmatpush1.msra.mxu0 %v147
    %406 = vmatprep.subr.mxu0 0.0
    %407 = vmatpush1.msra.mxu0 %v148
    %408 = vmatprep.subr.mxu0 0.0
    %409 = vmatpush1.msra.mxu0 %v149
    %410 = vmatprep.subr.mxu0 0.0
    %411 = vmatpush1.msra.mxu0 %v150
    %412 = vmatprep.subr.mxu0 0.0
    %413 = vmatpush1.msra.mxu0 %v151
    %414 = vmatprep.subr.mxu0 0.0
    %415 = vmatpush1.msra.mxu0 %v152
    %416 = vmatprep.subr.mxu0 0.0
    %417 = vmatpush1.msra.mxu0 %v153
    %418 = vmatprep.subr.mxu0 0.0
    %419 = vmatpush1.msra.mxu0 %v154
    %420 = vmatprep.subr.mxu0 0.0
    %421 = vmatpush1.msra.mxu0 %v155
    %422 = vmatprep.subr.mxu0 0.0
    %423 = vmatpush1.msra.mxu0 %v156
    %424 = vmatprep.subr.mxu0 0.0
    %425 = vmatpush1.msra.mxu0 %v157
    %426 = vmatprep.subr.mxu0 0.0
    %427 = vmatpush1.msra.mxu0 %v158
    %428 = vmatprep.subr.mxu0 0.0
    %429 = vmatpush1.msra.mxu0 %v159
    %430 = vmatprep.subr.mxu0 0.0
    %431 = vmatpush1.msra.mxu0 %v160
    %432 = vmatprep.subr.mxu0 0.0
    %433 = vmatpush1.msra.mxu0 %v161
    %434 = vmatprep.subr.mxu0 0.0
    %435 = vmatpush1.msra.mxu0 %v162
    %436 = vmatprep.subr.mxu0 0.0
    %437 = vmatpush1.msra.mxu0 %v163
    %438 = vmatprep.mubr.f32.mxu0 %v35
    %439 = vmatmul.mubr.f32.gmra.mrb[0].mxu0 %v34
    %v440 = vpop.f32.mrb[0].mxu0
    %v441 = vadd.f32 %v371, %v440
    %v442 = vpop.f32.mrb[0].mxu0
    %443 = vdwg.mxu0
    %v444 = vadd.f32 %v27, %v441
    %445 = vst [vmem:[#allocation2] sm:$0xff] %v444
    // Predicated region
    $region18: #{tpu_custom_call.1} parent=1 // pred_check
      _
    $region19: #{tpu_custom_call.1} parent=1 // pred_check_branch
      %447 = sbr.rel (0) target = $region21
    $region20: #{tpu_custom_call.1} parent=1 // pred_region
      %s449 = ssub.s32 128, 128
      %450 = vsyncadd [#allocation3], %s449
      %s452 = sshll.u32 [#allocation2], 4
      %s453 = int_to_ptr.vmem [resolvable:$true] %s452
      %455 = dma.vmem_to_hbm [thread:$0]  %s453, 128, %s3, [#allocation3]
    $region21: #{tpu_custom_call.1} parent=1 // pred_fallthru
      _
    // Predicated region
    $region22: #{tpu_custom_call.1} parent=1 // pred_check
      _
    $region23: #{tpu_custom_call.1} parent=1 // pred_check_branch
      %457 = sbr.rel (0) target = $region25
    $region24: #{tpu_custom_call.1} parent=1 // pred_region
      %458 = dma.done [#allocation3], 128
    $region25: #{tpu_custom_call.1} parent=1 // pred_fallthru
      _
    %459 = vsyncpa [#allocation3], 1

</llo_original>
